<compile_context>
chip_gen: v5e
topology: v5e:2x2
jax: 0.10.0
libtpu: 0.0.40
codegen_flags: <defaults>
</compile_context>

<pallas_src>
import functools

import jax
import jax.numpy as jnp
from jax.experimental import pallas as pl
from jax.experimental.pallas import tpu as pltpu


def _layernorm_kernel(x_ref, o_ref, *, epsilon, hidden):
    # x_ref / o_ref: (tile_rows, hidden) VMEM tiles.
    x = x_ref[...]
    xf = x.astype(jnp.float32)

    # One-pass statistics: sum and sum of squares (single elementwise pass).
    sum_x = jnp.sum(xf, axis=-1, keepdims=True)
    sum_sq = jnp.sum(xf * xf, axis=-1, keepdims=True)

    mean = sum_x * (1.0 / hidden)
    denom = max(hidden - 1, 1)  # unbiased (N-1); guard hidden == 1
    var = (sum_sq - sum_x * mean) / denom
    var = jnp.maximum(var, 0.0)  # clamp tiny negative values from cancellation
    std = jnp.sqrt(var)

    # EUP approximate reciprocal: divide moves off the VALU slot.
    inv = pl.reciprocal(std + epsilon, approx=True)
    o_ref[...] = ((xf - mean) * inv).astype(o_ref.dtype)


def _pick_tile_rows(rows, hidden, dtype_size):
    """Largest multiple-of-8 row tile that fits the VMEM budget."""
    # Per-row footprint: in + out tiles (each double-buffered by the pipeline)
    # plus ~8 B/elem of fp32 intermediates inside the kernel body.
    per_row_bytes = hidden * (4 * dtype_size + 8)
    budget_bytes = 16 * 1024 * 1024  # fits a 32 MiB scoped limit on all gens
    tr = max(8, min(1024, (budget_bytes // per_row_bytes) // 8 * 8))

    rows_padded8 = max(8, ((rows + 7) // 8) * 8)
    tr = min(tr, rows_padded8)

    # Keep at least 2 grid steps when possible (v7x megacore load balance).
    if rows_padded8 >= 16 and tr > rows_padded8 // 2:
        half = ((rows_padded8 // 2 + 7) // 8) * 8
        tr = max(8, min(tr, half))
    return int(tr)


def layer_norm(x, epsilon=1e-5, *, tile_rows=None):
    """(x - mean) / (std + eps) over the last axis, unbiased std (torch.std_mean)."""
    orig_shape = x.shape
    hidden = orig_shape[-1]
    x2d = x.reshape(-1, hidden)
    rows = x2d.shape[0]
    dtype_size = jnp.dtype(x.dtype).itemsize

    if tile_rows is None:
        tile_rows = _pick_tile_rows(rows, hidden, dtype_size)

    grid = (pl.cdiv(rows, tile_rows),)

    out = pl.pallas_call(
        functools.partial(_layernorm_kernel, epsilon=float(epsilon), hidden=hidden),
        out_shape=jax.ShapeDtypeStruct((rows, hidden), x.dtype),
        grid_spec=pltpu.PrefetchScalarGridSpec(
            num_scalar_prefetch=0,
            grid=grid,
            in_specs=[pl.BlockSpec((tile_rows, hidden), lambda i: (i, 0))],
            out_specs=pl.BlockSpec((tile_rows, hidden), lambda i: (i, 0)),
        ),
        compiler_params=pltpu.CompilerParams(
            dimension_semantics=("parallel",),
            # 32 MiB: raises v5e's 16 MiB scoped default, matches v6e/v7x
            # defaults, and stays well inside v7x's 64 MiB physical VMEM.
            vmem_limit_bytes=32 * 1024 * 1024,
        ),
        cost_estimate=pl.CostEstimate(
            flops=5 * rows * hidden,
            transcendentals=2 * rows,  # sqrt + reciprocal per row
            bytes_accessed=2 * rows * hidden * dtype_size,
        ),
    )(x2d)

    return out.reshape(orig_shape)


if __name__ == "__main__":
    key = jax.random.PRNGKey(0)
    # Small (batch, seq, hidden) activation consistent with the module's usage.
    batch, seq, hidden = 2, 8, 32
    x = jax.random.normal(key, (batch, seq, hidden), dtype=jnp.float32)

    epsilon = 1e-5
    y = layer_norm(x, epsilon)
    jax.block_until_ready(y)

    # Reference check (pure JAX, matching torch.std_mean semantics).
    mean = jnp.mean(x, axis=-1, keepdims=True)
    var = jnp.sum((x - mean) ** 2, axis=-1, keepdims=True) / (hidden - 1)
    ref = (x - mean) / (jnp.sqrt(var) + epsilon)
    # Tolerance accounts for the EUP approximate reciprocal.
    assert jnp.allclose(y, ref, atol=1e-2, rtol=1e-2), "mismatch vs reference"

    print("KERNEL_OK")
</pallas_src>

<mosaic_0001>
module attributes {stable_mosaic.version = 11 : i64} {
  func.func @_layernorm_kernel(%arg0: i32, %arg1: memref<8x32xf32, #tpu.memory_space<vmem>>, %arg2: memref<8x32xf32, #tpu.memory_space<vmem>>) attributes {dimension_semantics = [#tpu.dimension_semantics<parallel>], iteration_bounds = array<i64: 2>, scalar_prefetch = 0 : i64, scratch_operands = 0 : i64, tpu.core_type = #tpu.core_type<tc>, window_params = [{transform_indices = @transform_0, window_bounds = array<i64: 8, 32>}, {transform_indices = @transform_1, window_bounds = array<i64: 8, 32>}]} {
    %c0 = arith.constant 0 : index
    %c0_0 = arith.constant 0 : index
    %0 = vector.load %arg1[%c0, %c0_0] : memref<8x32xf32, #tpu.memory_space<vmem>>, vector<8x32xf32>
    %cst = arith.constant dense<0.000000e+00> : vector<8xf32>
    %1 = vector.multi_reduction <add>, %0, %cst [1] : vector<8x32xf32> to vector<8xf32>
    %2 = vector.shape_cast %1 : vector<8xf32> to vector<8x1xf32>
    %3 = arith.mulf %0, %0 : vector<8x32xf32>
    %cst_1 = arith.constant dense<0.000000e+00> : vector<8xf32>
    %4 = vector.multi_reduction <add>, %3, %cst_1 [1] : vector<8x32xf32> to vector<8xf32>
    %5 = vector.shape_cast %4 : vector<8xf32> to vector<8x1xf32>
    %cst_2 = arith.constant 3.125000e-02 : f32
    %6 = vector.broadcast %cst_2 : f32 to vector<8x1xf32>
    %7 = arith.mulf %2, %6 : vector<8x1xf32>
    %8 = arith.mulf %2, %7 : vector<8x1xf32>
    %9 = arith.subf %5, %8 : vector<8x1xf32>
    %cst_3 = arith.constant 3.100000e+01 : f32
    %10 = vector.broadcast %cst_3 : f32 to vector<8x1xf32>
    %11 = arith.divf %9, %10 : vector<8x1xf32>
    %cst_4 = arith.constant 0.000000e+00 : f32
    %12 = vector.broadcast %cst_4 : f32 to vector<8x1xf32>
    %13 = arith.maximumf %11, %12 : vector<8x1xf32>
    %14 = math.sqrt %13 : vector<8x1xf32>
    %cst_5 = arith.constant 9.99999974E-6 : f32
    %15 = vector.broadcast %cst_5 : f32 to vector<8x1xf32>
    %16 = arith.addf %14, %15 : vector<8x1xf32>
    %17 = tpu.reciprocal %16 {approx = true} : vector<8x1xf32> -> vector<8x1xf32>
    %18 = vector.broadcast %7 : vector<8x1xf32> to vector<8x32xf32>
    %19 = arith.subf %0, %18 : vector<8x32xf32>
    %20 = vector.broadcast %17 : vector<8x1xf32> to vector<8x32xf32>
    %21 = arith.mulf %19, %20 : vector<8x32xf32>
    %c0_6 = arith.constant 0 : index
    %c0_7 = arith.constant 0 : index
    %22 = vector.load %arg2[%c0_6, %c0_7] : memref<8x32xf32, #tpu.memory_space<vmem>>, vector<8x32xf32>
    tpu.vector_store %arg2[%c0_6, %c0_7], %21 {strides = array<i32>} : memref<8x32xf32, #tpu.memory_space<vmem>>, vector<8x32xf32>,
    return
  }
  func.func @transform_0(%arg0: i32) -> (i32, i32) {
    %c0_i32 = arith.constant 0 : i32
    %c0_i32_0 = arith.constant 0 : i32
    return %arg0, %c0_i32 : i32, i32
  }
  func.func @transform_1(%arg0: i32) -> (i32, i32) {
    %c0_i32 = arith.constant 0 : i32
    %c0_i32_0 = arith.constant 0 : i32
    return %arg0, %c0_i32 : i32, i32
  }
}

</mosaic_0001>

<llo_original>
// kernel: tpu_custom_call.1
$region0: #{tpu_custom_call.1}
  #allocation0 [shape = 'u32[]', space=smem, size = 0x4, offset = 0x4, fixed_abs, tag = 'smem constant byte address 0x4 - core index']
  #allocation1 [shape = 'u32[72,128]{1,0:T(1,128)}', space=vmem, size = 0x9000, scoped, tag = 'internal scratch']
  %s0 = inlined_call_operand.hbm [shape: f32[16,32], index: 0, kind: input, shape index: {}]
  %s1 = inlined_call_operand.hbm [shape: f32[16,32], index: 1, kind: output, shape index: {}]
  %s2 = sld [smem:[#allocation0]]
  $region41: #{tpu_custom_call.1} parent=0
    _
  %s4 = ssub.s32 1, %s2
  %s5 = scalar_select 0, %s4, %s2
  $region1: #{tpu_custom_call.1} parent=0
    #allocation2 [shape = 'u8[8192]{0}', space=vmem, size = 0x2000, scoped, tag = 'input window, operand 0']
    #allocation3 [shape = 's32[2]{0}', space=sflag, size = 0x8, scoped, tag = 'scoped memory for tpu_custom_call.1']
    #allocation4 [shape = 's32[2]{0}', space=sflag, size = 0x8, scoped, tag = 'scoped memory for tpu_custom_call.1']
    #allocation5 [shape = 'u8[8192]{0}', space=vmem, size = 0x2000, scoped, tag = 'output window, operand 0']
    %6 = vsyncpa [#allocation3], 0
    %s7 = scalar_lea.sflag [#allocation3], 1
    %8 = vsyncpa %s7, 0
    %9 = vsyncpa [#allocation4], 0
    %s10 = scalar_lea.sflag [#allocation4], 1
    %11 = vsyncpa %s10, 0
    loop: start=0, step=1, limit=4
    $region2: #{tpu_custom_call.1} parent=1 // loop_pre_header
      _
    $region3: #{tpu_custom_call.1} parent=1 // loop_header
      %s13 = sphi 0, %s17
      %p14 = scmp.ge.s32.totalorder %s13, 4
      %s23 = sphi 0, %s25
      %s26 = sphi 0, %s23
      %s27 = sphi 0, %s26
      %s43 = sphi 0, %s27
      %s49 = sphi 0, %s51
      %s52 = sphi 0, %s49
      %s53 = sphi 0, %s52
      %s69 = sphi 0, %s53
    $region4: #{tpu_custom_call.1} parent=1 // loop_header_branch
      %16 = sbr.rel (%p14) target = $region8
    $region5: #{tpu_custom_call.1} parent=1 // loop_body
      %s18 = ssub.s32 %s13, 1
      %s19 = ssub.s32 %s13, 2
      %s20 = sadd.s32 %s13, 1
      %s21 = ssub.s32 %s13, %s20
      %p22 = scmp.eq.s32.totalorder %s21, 0
      %s24 = sadd.s32 %s23, 1
      %s25 = scalar_select %p22, %s23, %s24
      %p28 = pneg %p22
      %p29 = scmp.eq.s32.totalorder %s13, 1
      %p30 = por %p28, %p29
      %p31 = scmp.ne.s32.totalorder %s23, %s26
      %p32 = scmp.eq.s32.totalorder %s13, 0
      %p33 = por %p31, %p32
      %p34 = scmp.ne.s32.totalorder %s23, %s26
      %p35 = scmp.eq.s32.totalorder %s18, 1
      %p36 = por %p34, %p35
      %p37 = scmp.ne.s32.totalorder %s26, %s27
      %p38 = scmp.eq.s32.totalorder %s18, 0
      %p39 = por %p37, %p38
      %p40 = scmp.ne.s32.totalorder %s26, %s27
      %p41 = scmp.eq.s32.totalorder %s19, 1
      %p42 = por %p40, %p41
      %p44 = scmp.ne.s32.totalorder %s27, %s43
      %p45 = scmp.eq.s32.totalorder %s19, 0
      %p46 = por %p44, %p45
      %s47 = ssub.s32 %s13, %s20
      %p48 = scmp.eq.s32.totalorder %s47, 0
      %s50 = sadd.s32 %s49, 1
      %s51 = scalar_select %p48, %s49, %s50
      %p54 = pneg %p48
      %p55 = scmp.eq.s32.totalorder %s13, 1
      %p56 = por %p54, %p55
      %p57 = scmp.ne.s32.totalorder %s49, %s52
      %p58 = scmp.eq.s32.totalorder %s13, 0
      %p59 = por %p57, %p58
      %p60 = scmp.ne.s32.totalorder %s49, %s52
      %p61 = scmp.eq.s32.totalorder %s18, 1
      %p62 = por %p60, %p61
      %p63 = scmp.ne.s32.totalorder %s52, %s53
      %p64 = scmp.eq.s32.totalorder %s18, 0
      %p65 = por %p63, %p64
      %p66 = scmp.ne.s32.totalorder %s52, %s53
      %p67 = scmp.eq.s32.totalorder %s19, 1
      %p68 = por %p66, %p67
      %p70 = scmp.ne.s32.totalorder %s53, %s69
      %p71 = scmp.eq.s32.totalorder %s19, 0
      %p72 = por %p70, %p71
      %p73 = scmp.le.s32.totalorder 1, %s13
      %p74 = scmp.lt.s32.totalorder %s13, 3
      %p75 = pnand %p73, %p74
      %p76 = pneg %p75
      // Predicated region
      $region9: #{tpu_custom_call.1} parent=5 // pred_check
        _
      $region10: #{tpu_custom_call.1} parent=5 // pred_check_branch
        %78 = sbr.rel (%p75) target = $region12
      $region11: #{tpu_custom_call.1} parent=5 // pred_region
        %s79 = ssub.s32 %s13, 1
      $region12: #{tpu_custom_call.1} parent=5 // pred_fallthru
        _
      %p80 = scmp.lt.s32.totalorder %s13, 2
      // Predicated region
      $region13: #{tpu_custom_call.1} parent=5 // pred_check
        %p81 = pneg %p80
      $region14: #{tpu_custom_call.1} parent=5 // pred_check_branch
        %83 = sbr.rel (%p81) target = $region16
      $region15: #{tpu_custom_call.1} parent=5 // pred_region
        // Predicated region
        $region17: #{tpu_custom_call.1} parent=15 // pred_check
          %p84 = pneg %p33
        $region18: #{tpu_custom_call.1} parent=15 // pred_check_branch
          %86 = sbr.rel (%p84) target = $region20
        $region19: #{tpu_custom_call.1} parent=15 // pred_region
          %s87 = sand.u32 %s23, 1
          %s88 = scalar_lea.sflag [#allocation3], %s87
          %s89 = sand.u32 %s23, 1
          %s90 = smul.addr %s89, 8
          %s91 = scalar_lea.vmem [#allocation2], %s90
          %93 = vsyncadd %s88, 0
          %s94 = smul.addr %s13, 8
          %s95 = scalar_lea.hbm %s0, %s94
          %s97 = sshll.u32 %s95, 4
          %s98 = int_to_ptr.hbm [resolvable:$true] %s97
          %s99 = sshll.u32 %s91, 4
          %s100 = int_to_ptr.vmem [resolvable:$true] %s99
          %102 = dma.hbm_to_vmem [thread:$0]  %s98, 128, %s100, %s88
        $region20: #{tpu_custom_call.1} parent=15 // pred_fallthru
          _
      $region16: #{tpu_custom_call.1} parent=5 // pred_fallthru
        _
      %p103 = scmp.le.s32.totalorder 1, %s13
      %p104 = scmp.lt.s32.totalorder %s13, 3
      %p105 = pnand %p103, %p104
      %p106 = pneg %p105
      // Predicated region
      $region21: #{tpu_custom_call.1} parent=5 // pred_check
        _
      $region22: #{tpu_custom_call.1} parent=5 // pred_check_branch
        %108 = sbr.rel (%p105) target = $region24
      $region23: #{tpu_custom_call.1} parent=5 // pred_region
        %s109 = ssub.s32 %s13, 1
        %s110 = sand.u32 %s26, 1
        %s111 = scalar_lea.sflag [#allocation3], %s110
        %s112 = sand.u32 %s26, 1
        %s113 = smul.addr %s112, 8
        %s114 = scalar_lea.vmem [#allocation2], %s113
        // Predicated region
        $region25: #{tpu_custom_call.1} parent=23 // pred_check
          %p115 = pneg %p39
        $region26: #{tpu_custom_call.1} parent=23 // pred_check_branch
          %117 = sbr.rel (%p115) target = $region28
        $region27: #{tpu_custom_call.1} parent=23 // pred_region
          %119 = dma.done %s111, 128
        $region28: #{tpu_custom_call.1} parent=23 // pred_fallthru
          _
        %s120 = sand.u32 %s26, 1
        %s121 = scalar_lea.sflag [#allocation3], %s120
        %s122 = sand.u32 %s26, 1
        %s123 = smul.addr %s122, 8
        %s124 = scalar_lea.vmem [#allocation2], %s123
        %p125 = pneg %p39
        %p126 = pneg %p36
        %p127 = pneg %p65
        %p128 = pneg %p62
        %s129 = sand.u32 %s52, 1
        %s130 = scalar_lea.sflag [#allocation4], %s129
        %s131 = sand.u32 %s52, 1
        %s132 = smul.addr %s131, 8
        %s133 = scalar_lea.vmem [#allocation5], %s132
        %v134 = vld [vmem:[%s114] sm:$0xff]
        %vm135 = vcmask 261120
        %v136 = vsel %vm135, %v134, 0.0
        %137 = vadd.xlane.f32.xlu0 %v136
        %v138 = vpop.xlane.xlu0 %137
        %v139 = vmul.f32 %v134, %v134
        %v140 = vsel %vm135, %v139, 0.0
        %141 = vadd.xlane.f32.xlu0 %v140
        %v142 = vpop.xlane.xlu0 %141
        %v143 = vmul.f32 %v138, 0.03125
        %v144 = vmul.f32 %v138, %v143
        %v145 = vsub.f32 %v142, %v144
        %v146 = vrcp.pop 31.0
        %v147 = vmul.f32 31.0, %v146
        %v148 = vsub.f32 1.0, %v147
        %v149 = vmul.f32 %v146, %v148
        %v150 = vadd.f32 %v146, %v149
        %vm151 = vweird.f32 %v146
        %v152 = vsel %vm151, %v146, %v150
        %v153 = vmul.f32 %v145, %v152
        %v154 = vmax.f32 %v153, 0.0
        %v155 = vrsqrt.pop %v154
        %v156 = vmul.f32 %v155, %v154
        %v157 = vmul.f32 %v156, %v155
        %v158 = vmul.f32 0.5, %v157
        %v159 = vsub.f32 1.5, %v158
        %v160 = vmul.f32 %v155, %v159
        %v161 = vmul.f32 %v154, %v160
        %vm162 = vcmp.eq.f32.partialorder %v154, inf
        %v163 = vsel %vm162, %v154, %v161
        %vm164 = vcmp.eq.f32.partialorder %v154, 0.0
        %v165 = vand.u32 %v154, 2147483648
        %v166 = vsel %vm164, %v165, %v163
        %v167 = vadd.f32 %v166, 1e-05
        %v168 = vrcp.pop %v167
        %v169 = vsub.f32 %v134, %v143
        %v170 = vmul.f32 %v169, %v168
        %171 = vst.msk [vmem:[%s133] sm:$0xff] %vm135, %v170
        %s172 = sand.u32 %s52, 1
        %s173 = scalar_lea.sflag [#allocation4], %s172
        %s174 = sand.u32 %s52, 1
        %s175 = smul.addr %s174, 8
        %s176 = scalar_lea.vmem [#allocation5], %s175
        // Predicated region
        $region29: #{tpu_custom_call.1} parent=23 // pred_check
          %p177 = pneg %p62
        $region30: #{tpu_custom_call.1} parent=23 // pred_check_branch
          %179 = sbr.rel (%p177) target = $region32
        $region31: #{tpu_custom_call.1} parent=23 // pred_region
          %181 = vsyncadd %s173, 0
          %s182 = smul.addr %s18, 8
          %s183 = scalar_lea.hbm %s1, %s182
          %s185 = sshll.u32 %s176, 4
          %s186 = int_to_ptr.vmem [resolvable:$true] %s185
          %s187 = sshll.u32 %s183, 4
          %s188 = int_to_ptr.hbm [resolvable:$true] %s187
          %190 = dma.vmem_to_hbm [thread:$0]  %s186, 128, %s188, %s173
        $region32: #{tpu_custom_call.1} parent=23 // pred_fallthru
          _
      $region24: #{tpu_custom_call.1} parent=5 // pred_fallthru
        _
      %p191 = scmp.le.s32.totalorder 2, %s13
      // Predicated region
      $region33: #{tpu_custom_call.1} parent=5 // pred_check
        %p192 = pneg %p191
      $region34: #{tpu_custom_call.1} parent=5 // pred_check_branch
        %194 = sbr.rel (%p192) target = $region36
      $region35: #{tpu_custom_call.1} parent=5 // pred_region
        %s195 = ssub.s32 %s13, 2
        // Predicated region
        $region37: #{tpu_custom_call.1} parent=35 // pred_check
          %p196 = pneg %p68
        $region38: #{tpu_custom_call.1} parent=35 // pred_check_branch
          %198 = sbr.rel (%p196) target = $region40
        $region39: #{tpu_custom_call.1} parent=35 // pred_region
          %s199 = sand.u32 %s53, 1
          %s200 = scalar_lea.sflag [#allocation4], %s199
          %s201 = sand.u32 %s53, 1
          %s202 = smul.addr %s201, 8
          %s203 = scalar_lea.vmem [#allocation5], %s202
          %205 = dma.done %s200, 128
        $region40: #{tpu_custom_call.1} parent=35 // pred_fallthru
          _
      $region36: #{tpu_custom_call.1} parent=5 // pred_fallthru
        _
    $region6: #{tpu_custom_call.1} parent=1 // loop_footer
      %s17 = sadd.s32 1, %s13
    $region7: #{tpu_custom_call.1} parent=1 // loop_footer_branch
      %12 = sbr.rel target = $region3
    $region8: #{tpu_custom_call.1} parent=1 // loop_exit
      _
    %206 = vsyncpa [#allocation3], 1
    %s207 = scalar_lea.sflag [#allocation3], 1
    %208 = vsyncpa %s207, 1
    %209 = vsyncpa [#allocation4], 1
    %s210 = scalar_lea.sflag [#allocation4], 1
    %211 = vsyncpa %s210, 1

</llo_original>
